<compile_context>
chip_gen: v7x
topology: tpu7x:2x2x1
jax: 0.10.0
libtpu: 0.0.40
codegen_flags: <defaults>
</compile_context>

<pallas_src>
import jax
import jax.numpy as jnp
from jax.experimental import pallas as pl
from jax.experimental.pallas import tpu as pltpu


def _round_up(x, m):
    return ((x + m - 1) // m) * m


def _wl1_tile_kernel(e_ref, t_ref, cnt_ref, sum_ref, cnt_acc, sum_acc):
    # e_ref / t_ref : (1, TM, L) VMEM blocks (input dtype)
    # cnt_ref/sum_ref: (1, 1, L) f32 per-batch outputs (written at last tile)
    # cnt_acc/sum_acc: (1, L) f32 VMEM scratch accumulators
    k = pl.program_id(1)

    @pl.when(k == 0)
    def _init():
        cnt_acc[...] = jnp.zeros_like(cnt_acc)
        sum_acc[...] = jnp.zeros_like(sum_acc)

    e = e_ref[0]                                   # (TM, L)
    t = t_ref[0]

    # per-lane positive counts and per-lane |e - t| partial sums (f32 accum)
    cnt_acc[...] += jnp.sum((e > 0).astype(jnp.float32), axis=0, keepdims=True)
    sum_acc[...] += jnp.sum(jnp.abs((e - t).astype(jnp.float32)),
                            axis=0, keepdims=True)

    @pl.when(k == pl.num_programs(1) - 1)
    def _finalize():
        cnt_ref[0] = cnt_acc[...]
        sum_ref[0] = sum_acc[...]


def weighted_l1_loss(estimates, targets, tile_rows=2048):
    """Forward pass of WeightedL1Loss (scalar f32 loss)."""
    shape = targets.shape
    B, C = shape[0], shape[-1]
    e = estimates.reshape(B, -1, C)
    t = targets.reshape(B, -1, C)
    M = e.shape[1]

    # Lane-dense layout: fold middle rows into the 128-lane axis when C | 128.
    if C < 128 and 128 % C == 0:
        L = 128
    else:
        L = C            # fallback: use C directly as the lane dim
    G = L // C

    rows = pl.cdiv(M * C, L)                      # L-wide rows per batch elem
    TM = _round_up(min(tile_rows, _round_up(rows, 8)), 8)
    rows_p = _round_up(rows, TM)
    num_tiles = rows_p // TM
    M_p = rows_p * L // C                         # padded middle length

    if M_p != M:
        # Zero-pad BOTH inputs so padded rows contribute 0 to counts and L1.
        pad = ((0, 0), (0, M_p - M), (0, 0))
        e = jnp.pad(e, pad)
        t = jnp.pad(t, pad)

    e2 = e.reshape(B, rows_p, L)
    t2 = t.reshape(B, rows_p, L)

    cnt_l, sum_l = pl.pallas_call(
        _wl1_tile_kernel,
        out_shape=(
            jax.ShapeDtypeStruct((B, 1, L), jnp.float32),
            jax.ShapeDtypeStruct((B, 1, L), jnp.float32),
        ),
        grid_spec=pltpu.PrefetchScalarGridSpec(
            num_scalar_prefetch=0,
            grid=(B, num_tiles),
            in_specs=[
                pl.BlockSpec((1, TM, L), lambda b, k: (b, k, 0)),
                pl.BlockSpec((1, TM, L), lambda b, k: (b, k, 0)),
            ],
            out_specs=(
                pl.BlockSpec((1, 1, L), lambda b, k: (b, 0, 0)),
                pl.BlockSpec((1, 1, L), lambda b, k: (b, 0, 0)),
            ),
            scratch_shapes=[
                pltpu.VMEM((1, L), jnp.float32),
                pltpu.VMEM((1, L), jnp.float32),
            ],
        ),
        compiler_params=pltpu.CompilerParams(
            dimension_semantics=("parallel", "arbitrary")),
    )(e2, t2)

    # Fold lane groups back to channels: lane l holds channel l % C.
    cnt_c = cnt_l.reshape(B, G, C).sum(axis=1)     # (B, C)
    sum_c = sum_l.reshape(B, G, C).sum(axis=1)     # (B, C)

    # weights = C * L1_normalize(1/cnt, dim=-1, eps=1e-12)
    # (inf/NaN on zero-count channels intentionally matches PyTorch)
    inv = 1.0 / cnt_c
    denom = jnp.maximum(jnp.sum(jnp.abs(inv), axis=-1, keepdims=True),
                        jnp.float32(1e-12))
    w = (jnp.float32(C) * inv) / denom             # (B, C)

    # weighted sum, then mean over the ORIGINAL B*M*C elements
    return jnp.sum(sum_c * w) / jnp.float32(B * M * C)


if __name__ == "__main__":
    key = jax.random.PRNGKey(0)
    k1, k2 = jax.random.split(key)
    shape = (2, 4, 16, 16)   # (B, d1, d2, C) -> viewed as (2, 64, 16)
    estimates = jax.random.normal(k1, shape, dtype=jnp.float32)
    targets = jax.random.normal(k2, shape, dtype=jnp.float32)

    loss = weighted_l1_loss(estimates, targets)
    jax.block_until_ready(loss)

    # pure-JAX reference (same math as the PyTorch module)
    B, C = shape[0], shape[-1]
    e = estimates.reshape(B, -1, C)
    t = targets.reshape(B, -1, C)
    cnt = jnp.sum(e > 0, axis=1).astype(jnp.float32)
    inv = 1.0 / cnt
    w = C * inv / jnp.maximum(
        jnp.sum(jnp.abs(inv), axis=-1, keepdims=True), 1e-12)
    ref = jnp.mean(jnp.abs(e - t) * w[:, None, :])

    assert jnp.allclose(loss, ref, rtol=1e-5, atol=1e-6), (loss, ref)
    print("KERNEL_OK")
</pallas_src>

<mosaic_0001>
module attributes {stable_mosaic.version = 11 : i64} {
  func.func @_wl1_tile_kernel(%arg0: i32, %arg1: i32, %arg2: memref<1x8x128xf32, #tpu.memory_space<vmem>>, %arg3: memref<1x8x128xf32, #tpu.memory_space<vmem>>, %arg4: memref<1x1x128xf32, #tpu.memory_space<vmem>>, %arg5: memref<1x1x128xf32, #tpu.memory_space<vmem>>, %arg6: memref<1x128xf32, #tpu.memory_space<vmem>>, %arg7: memref<1x128xf32, #tpu.memory_space<vmem>>) attributes {dimension_semantics = [#tpu.dimension_semantics<parallel>, #tpu.dimension_semantics<arbitrary>], iteration_bounds = array<i64: 2, 1>, scalar_prefetch = 0 : i64, scratch_operands = 2 : i64, tpu.core_type = #tpu.core_type<tc>, window_params = [{transform_indices = @transform_0, window_bounds = array<i64: 1, 8, 128>}, {transform_indices = @transform_1, window_bounds = array<i64: 1, 8, 128>}, {transform_indices = @transform_2, window_bounds = array<i64: 1, 1, 128>}, {transform_indices = @transform_3, window_bounds = array<i64: 1, 1, 128>}]} {
    %c0_i32 = arith.constant 0 : i32
    %0 = arith.cmpi eq, %arg1, %c0_i32 : i32
    %1 = arith.extui %0 : i1 to i32
    %c0_i32_0 = arith.constant 0 : i32
    %2 = arith.cmpi ne, %1, %c0_i32_0 : i32
    scf.if %2 {
      %cst_18 = arith.constant 0.000000e+00 : f32
      %26 = vector.broadcast %cst_18 : f32 to vector<1x128xf32>
      %c0_19 = arith.constant 0 : index
      %c0_20 = arith.constant 0 : index
      %27 = vector.load %arg6[%c0_19, %c0_20] : memref<1x128xf32, #tpu.memory_space<vmem>>, vector<1x128xf32>
      tpu.vector_store %arg6[%c0_19, %c0_20], %26 {strides = array<i32>} : memref<1x128xf32, #tpu.memory_space<vmem>>, vector<1x128xf32>,
      %cst_21 = arith.constant 0.000000e+00 : f32
      %28 = vector.broadcast %cst_21 : f32 to vector<1x128xf32>
      %c0_22 = arith.constant 0 : index
      %c0_23 = arith.constant 0 : index
      %29 = vector.load %arg7[%c0_22, %c0_23] : memref<1x128xf32, #tpu.memory_space<vmem>>, vector<1x128xf32>
      tpu.vector_store %arg7[%c0_22, %c0_23], %28 {strides = array<i32>} : memref<1x128xf32, #tpu.memory_space<vmem>>, vector<1x128xf32>,
    } else {
    }
    %c0 = arith.constant 0 : index
    %c0_1 = arith.constant 0 : index
    %c0_2 = arith.constant 0 : index
    %3 = vector.load %arg2[%c0, %c0_1, %c0_2] : memref<1x8x128xf32, #tpu.memory_space<vmem>>, vector<1x8x128xf32>
    %4 = vector.shape_cast %3 : vector<1x8x128xf32> to vector<8x128xf32>
    %c0_3 = arith.constant 0 : index
    %c0_4 = arith.constant 0 : index
    %c0_5 = arith.constant 0 : index
    %5 = vector.load %arg3[%c0_3, %c0_4, %c0_5] : memref<1x8x128xf32, #tpu.memory_space<vmem>>, vector<1x8x128xf32>
    %6 = vector.shape_cast %5 : vector<1x8x128xf32> to vector<8x128xf32>
    %c0_6 = arith.constant 0 : index
    %c0_7 = arith.constant 0 : index
    %7 = vector.load %arg6[%c0_6, %c0_7] : memref<1x128xf32, #tpu.memory_space<vmem>>, vector<1x128xf32>
    %cst = arith.constant 0.000000e+00 : f32
    %8 = vector.broadcast %cst : f32 to vector<8x128xf32>
    %9 = arith.cmpf ogt, %4, %8 : vector<8x128xf32>
    %10 = arith.extui %9 : vector<8x128xi1> to vector<8x128xi32>
    %11 = arith.sitofp %10 : vector<8x128xi32> to vector<8x128xf32>
    %cst_8 = arith.constant dense<0.000000e+00> : vector<128xf32>
    %12 = vector.multi_reduction <add>, %11, %cst_8 [0] : vector<8x128xf32> to vector<128xf32>
    %13 = vector.shape_cast %12 : vector<128xf32> to vector<1x128xf32>
    %14 = arith.addf %7, %13 : vector<1x128xf32>
    %c0_9 = arith.constant 0 : index
    %c0_10 = arith.constant 0 : index
    %15 = vector.load %arg6[%c0_9, %c0_10] : memref<1x128xf32, #tpu.memory_space<vmem>>, vector<1x128xf32>
    tpu.vector_store %arg6[%c0_9, %c0_10], %14 {strides = array<i32>} : memref<1x128xf32, #tpu.memory_space<vmem>>, vector<1x128xf32>,
    %c0_11 = arith.constant 0 : index
    %c0_12 = arith.constant 0 : index
    %16 = vector.load %arg7[%c0_11, %c0_12] : memref<1x128xf32, #tpu.memory_space<vmem>>, vector<1x128xf32>
    %17 = arith.subf %4, %6 : vector<8x128xf32>
    %18 = math.absf %17 : vector<8x128xf32>
    %cst_13 = arith.constant dense<0.000000e+00> : vector<128xf32>
    %19 = vector.multi_reduction <add>, %18, %cst_13 [0] : vector<8x128xf32> to vector<128xf32>
    %20 = vector.shape_cast %19 : vector<128xf32> to vector<1x128xf32>
    %21 = arith.addf %16, %20 : vector<1x128xf32>
    %c0_14 = arith.constant 0 : index
    %c0_15 = arith.constant 0 : index
    %22 = vector.load %arg7[%c0_14, %c0_15] : memref<1x128xf32, #tpu.memory_space<vmem>>, vector<1x128xf32>
    tpu.vector_store %arg7[%c0_14, %c0_15], %21 {strides = array<i32>} : memref<1x128xf32, #tpu.memory_space<vmem>>, vector<1x128xf32>,
    %c0_i32_16 = arith.constant 0 : i32
    %23 = arith.cmpi eq, %arg1, %c0_i32_16 : i32
    %24 = arith.extui %23 : i1 to i32
    %c0_i32_17 = arith.constant 0 : i32
    %25 = arith.cmpi ne, %24, %c0_i32_17 : i32
    scf.if %25 {
      %c0_18 = arith.constant 0 : index
      %c0_19 = arith.constant 0 : index
      %26 = vector.load %arg6[%c0_18, %c0_19] : memref<1x128xf32, #tpu.memory_space<vmem>>, vector<1x128xf32>
      %c0_20 = arith.constant 0 : index
      %c0_21 = arith.constant 0 : index
      %c0_22 = arith.constant 0 : index
      %27 = vector.load %arg4[%c0_20, %c0_21, %c0_22] : memref<1x1x128xf32, #tpu.memory_space<vmem>>, vector<1x1x128xf32>
      %28 = vector.shape_cast %27 : vector<1x1x128xf32> to vector<1x128xf32>
      %29 = vector.shape_cast %26 : vector<1x128xf32> to vector<1x1x128xf32>
      tpu.vector_store %arg4[%c0_20, %c0_21, %c0_22], %29 {strides = array<i32>} : memref<1x1x128xf32, #tpu.memory_space<vmem>>, vector<1x1x128xf32>,
      %c0_23 = arith.constant 0 : index
      %c0_24 = arith.constant 0 : index
      %30 = vector.load %arg7[%c0_23, %c0_24] : memref<1x128xf32, #tpu.memory_space<vmem>>, vector<1x128xf32>
      %c0_25 = arith.constant 0 : index
      %c0_26 = arith.constant 0 : index
      %c0_27 = arith.constant 0 : index
      %31 = vector.load %arg5[%c0_25, %c0_26, %c0_27] : memref<1x1x128xf32, #tpu.memory_space<vmem>>, vector<1x1x128xf32>
      %32 = vector.shape_cast %31 : vector<1x1x128xf32> to vector<1x128xf32>
      %33 = vector.shape_cast %30 : vector<1x128xf32> to vector<1x1x128xf32>
      tpu.vector_store %arg5[%c0_25, %c0_26, %c0_27], %33 {strides = array<i32>} : memref<1x1x128xf32, #tpu.memory_space<vmem>>, vector<1x1x128xf32>,
    } else {
    }
    return
  }
  func.func @transform_0(%arg0: i32, %arg1: i32) -> (i32, i32, i32) {
    %c0_i32 = arith.constant 0 : i32
    %c0_i32_0 = arith.constant 0 : i32
    return %arg0, %arg1, %c0_i32 : i32, i32, i32
  }
  func.func @transform_1(%arg0: i32, %arg1: i32) -> (i32, i32, i32) {
    %c0_i32 = arith.constant 0 : i32
    %c0_i32_0 = arith.constant 0 : i32
    return %arg0, %arg1, %c0_i32 : i32, i32, i32
  }
  func.func @transform_2(%arg0: i32, %arg1: i32) -> (i32, i32, i32) {
    %c0_i32 = arith.constant 0 : i32
    %c0_i32_0 = arith.constant 0 : i32
    %c0_i32_1 = arith.constant 0 : i32
    return %arg0, %c0_i32, %c0_i32_0 : i32, i32, i32
  }
  func.func @transform_3(%arg0: i32, %arg1: i32) -> (i32, i32, i32) {
    %c0_i32 = arith.constant 0 : i32
    %c0_i32_0 = arith.constant 0 : i32
    %c0_i32_1 = arith.constant 0 : i32
    return %arg0, %c0_i32, %c0_i32_0 : i32, i32, i32
  }
}

</mosaic_0001>

<llo_original>
// kernel: tpu_custom_call.1
$region0: #{tpu_custom_call.1}
  #allocation0 [shape = 'u32[]', space=smem, size = 0x4, offset = 0x4, fixed_abs, tag = 'smem constant byte address 0x4 - core index']
  #allocation1 [shape = 'u32[144,128]{1,0:T(1,128)}', space=vmem, size = 0x12000, scoped, tag = 'internal scratch']
  #allocation2 [shape = 'f32[1,128]{1,0:T(1,128)}', space=vmem, size = 0x200, scoped, tag = 'scratch operand']
  #allocation3 [shape = 'f32[1,128]{1,0:T(1,128)}', space=vmem, size = 0x200, scoped, tag = 'scratch operand']
  %s0 = inlined_call_operand.hbm [shape: f32[2,8,128], index: 0, kind: input, shape index: {}]
  %s1 = inlined_call_operand.hbm [shape: f32[2,8,128], index: 1, kind: input, shape index: {}]
  %s2 = inlined_call_operand.hbm [shape: f32[2,1,128], index: 2, kind: output, shape index: {0}]
  %s3 = inlined_call_operand.hbm [shape: f32[2,1,128], index: 3, kind: output, shape index: {1}]
  %4 = xla_tuple %s2, %s3
  %s5 = sld [smem:[#allocation0]]
  $region65: #{tpu_custom_call.1} parent=0
    _
  %s7 = ssub.s32 1, %s5
  %s8 = scalar_select 0, %s7, %s5
  $region1: #{tpu_custom_call.1} parent=0
    #allocation4 [shape = 'u8[8192]{0}', space=vmem, size = 0x2000, scoped, tag = 'input window, operand 0']
    #allocation5 [shape = 's32[2]{0}', space=sflag, size = 0x8, scoped, tag = 'scoped memory for tpu_custom_call.1']
    #allocation6 [shape = 's32[2]{0}', space=sflag, size = 0x8, scoped, tag = 'scoped memory for tpu_custom_call.1']
    #allocation7 [shape = 'u8[8192]{0}', space=vmem, size = 0x2000, scoped, tag = 'input window, operand 1']
    #allocation8 [shape = 's32[2]{0}', space=sflag, size = 0x8, scoped, tag = 'scoped memory for tpu_custom_call.1']
    #allocation9 [shape = 'u8[1024]{0}', space=vmem, size = 0x400, scoped, tag = 'output window, operand 0']
    #allocation10 [shape = 'u8[1024]{0}', space=vmem, size = 0x400, scoped, tag = 'output window, operand 1']
    #allocation11 [shape = 's32[2]{0}', space=sflag, size = 0x8, scoped, tag = 'scoped memory for tpu_custom_call.1']
    %9 = vsyncpa [#allocation5], 0
    %s10 = scalar_lea.sflag [#allocation5], 1
    %11 = vsyncpa %s10, 0
    %12 = vsyncpa [#allocation8], 0
    %s13 = scalar_lea.sflag [#allocation8], 1
    %14 = vsyncpa %s13, 0
    %15 = vsyncpa [#allocation6], 0
    %s16 = scalar_lea.sflag [#allocation6], 1
    %17 = vsyncpa %s16, 0
    %18 = vsyncpa [#allocation11], 0
    %s19 = scalar_lea.sflag [#allocation11], 1
    %20 = vsyncpa %s19, 0
    loop: start=0, step=1, limit=4
    $region2: #{tpu_custom_call.1} parent=1 // loop_pre_header
      _
    $region3: #{tpu_custom_call.1} parent=1 // loop_header
      %s22 = sphi 0, %s26
      %p23 = scmp.ge.s32.totalorder %s22, 4
      %s29 = sphi 0, %s41
      %s30 = sphi 0, %s37
      %s31 = sphi 0, %s29
      %s32 = sphi 0, %s30
      %s33 = sphi 0, %s31
      %s34 = sphi 0, %s32
      %s46 = sphi 0, %s48
      %s49 = sphi 0, %s46
      %s50 = sphi 0, %s49
      %s66 = sphi 0, %s50
      %s74 = sphi 0, %s76
      %s77 = sphi 0, %s74
      %s78 = sphi 0, %s77
      %s94 = sphi 0, %s78
      %s100 = sphi 0, %s102
      %s103 = sphi 0, %s100
      %s104 = sphi 0, %s103
      %s120 = sphi 0, %s104
      %s126 = sphi 0, %s128
      %s129 = sphi 0, %s126
      %s130 = sphi 0, %s129
      %s146 = sphi 0, %s130
    $region4: #{tpu_custom_call.1} parent=1 // loop_header_branch
      %25 = sbr.rel (%p23) target = $region8
    $region5: #{tpu_custom_call.1} parent=1 // loop_body
      %s27 = ssub.s32 %s22, 1
      %s28 = ssub.s32 %s22, 2
      %s35 = sadd.s32 1, %s30
      %p36 = scmp.ge.s32.totalorder %s35, 1
      %s37 = scalar_select %p36, 0, %s35
      %s38 = sadd.s32 1, %s29
      %s39 = scalar_select %p36, %s38, %s29
      %p40 = scmp.ge.s32.totalorder %s39, 2
      %s41 = scalar_select %p40, 0, %s39
      %s42 = ssub.s32 %s29, %s41
      %s43 = ssub.s32 %s30, %s37
      %s44 = sor.u32 %s42, %s43
      %p45 = scmp.eq.s32.totalorder %s44, 0
      %s47 = sadd.s32 %s46, 1
      %s48 = scalar_select %p45, %s46, %s47
      %p51 = pneg %p45
      %p52 = scmp.eq.s32.totalorder %s22, 1
      %p53 = por %p51, %p52
      %p54 = scmp.ne.s32.totalorder %s46, %s49
      %p55 = scmp.eq.s32.totalorder %s22, 0
      %p56 = por %p54, %p55
      %p57 = scmp.ne.s32.totalorder %s46, %s49
      %p58 = scmp.eq.s32.totalorder %s27, 1
      %p59 = por %p57, %p58
      %p60 = scmp.ne.s32.totalorder %s49, %s50
      %p61 = scmp.eq.s32.totalorder %s27, 0
      %p62 = por %p60, %p61
      %p63 = scmp.ne.s32.totalorder %s49, %s50
      %p64 = scmp.eq.s32.totalorder %s28, 1
      %p65 = por %p63, %p64
      %p67 = scmp.ne.s32.totalorder %s50, %s66
      %p68 = scmp.eq.s32.totalorder %s28, 0
      %p69 = por %p67, %p68
      %s70 = ssub.s32 %s29, %s41
      %s71 = ssub.s32 %s30, %s37
      %s72 = sor.u32 %s70, %s71
      %p73 = scmp.eq.s32.totalorder %s72, 0
      %s75 = sadd.s32 %s74, 1
      %s76 = scalar_select %p73, %s74, %s75
      %p79 = pneg %p73
      %p80 = scmp.eq.s32.totalorder %s22, 1
      %p81 = por %p79, %p80
      %p82 = scmp.ne.s32.totalorder %s74, %s77
      %p83 = scmp.eq.s32.totalorder %s22, 0
      %p84 = por %p82, %p83
      %p85 = scmp.ne.s32.totalorder %s74, %s77
      %p86 = scmp.eq.s32.totalorder %s27, 1
      %p87 = por %p85, %p86
      %p88 = scmp.ne.s32.totalorder %s77, %s78
      %p89 = scmp.eq.s32.totalorder %s27, 0
      %p90 = por %p88, %p89
      %p91 = scmp.ne.s32.totalorder %s77, %s78
      %p92 = scmp.eq.s32.totalorder %s28, 1
      %p93 = por %p91, %p92
      %p95 = scmp.ne.s32.totalorder %s78, %s94
      %p96 = scmp.eq.s32.totalorder %s28, 0
      %p97 = por %p95, %p96
      %s98 = ssub.s32 %s29, %s41
      %p99 = scmp.eq.s32.totalorder %s98, 0
      %s101 = sadd.s32 %s100, 1
      %s102 = scalar_select %p99, %s100, %s101
      %p105 = pneg %p99
      %p106 = scmp.eq.s32.totalorder %s22, 1
      %p107 = por %p105, %p106
      %p108 = scmp.ne.s32.totalorder %s100, %s103
      %p109 = scmp.eq.s32.totalorder %s22, 0
      %p110 = por %p108, %p109
      %p111 = scmp.ne.s32.totalorder %s100, %s103
      %p112 = scmp.eq.s32.totalorder %s27, 1
      %p113 = por %p111, %p112
      %p114 = scmp.ne.s32.totalorder %s103, %s104
      %p115 = scmp.eq.s32.totalorder %s27, 0
      %p116 = por %p114, %p115
      %p117 = scmp.ne.s32.totalorder %s103, %s104
      %p118 = scmp.eq.s32.totalorder %s28, 1
      %p119 = por %p117, %p118
      %p121 = scmp.ne.s32.totalorder %s104, %s120
      %p122 = scmp.eq.s32.totalorder %s28, 0
      %p123 = por %p121, %p122
      %s124 = ssub.s32 %s29, %s41
      %p125 = scmp.eq.s32.totalorder %s124, 0
      %s127 = sadd.s32 %s126, 1
      %s128 = scalar_select %p125, %s126, %s127
      %p131 = pneg %p125
      %p132 = scmp.eq.s32.totalorder %s22, 1
      %p133 = por %p131, %p132
      %p134 = scmp.ne.s32.totalorder %s126, %s129
      %p135 = scmp.eq.s32.totalorder %s22, 0
      %p136 = por %p134, %p135
      %p137 = scmp.ne.s32.totalorder %s126, %s129
      %p138 = scmp.eq.s32.totalorder %s27, 1
      %p139 = por %p137, %p138
      %p140 = scmp.ne.s32.totalorder %s129, %s130
      %p141 = scmp.eq.s32.totalorder %s27, 0
      %p142 = por %p140, %p141
      %p143 = scmp.ne.s32.totalorder %s129, %s130
      %p144 = scmp.eq.s32.totalorder %s28, 1
      %p145 = por %p143, %p144
      %p147 = scmp.ne.s32.totalorder %s130, %s146
      %p148 = scmp.eq.s32.totalorder %s28, 0
      %p149 = por %p147, %p148
      %p150 = scmp.le.s32.totalorder 1, %s22
      %p151 = scmp.lt.s32.totalorder %s22, 3
      %p152 = pnand %p150, %p151
      %p153 = pneg %p152
      // Predicated region
      $region9: #{tpu_custom_call.1} parent=5 // pred_check
        _
      $region10: #{tpu_custom_call.1} parent=5 // pred_check_branch
        %155 = sbr.rel (%p152) target = $region12
      $region11: #{tpu_custom_call.1} parent=5 // pred_region
        %s156 = ssub.s32 %s22, 1
      $region12: #{tpu_custom_call.1} parent=5 // pred_fallthru
        _
      %p157 = scmp.lt.s32.totalorder %s22, 2
      // Predicated region
      $region13: #{tpu_custom_call.1} parent=5 // pred_check
        %p158 = pneg %p157
      $region14: #{tpu_custom_call.1} parent=5 // pred_check_branch
        %160 = sbr.rel (%p158) target = $region16
      $region15: #{tpu_custom_call.1} parent=5 // pred_region
        // Predicated region
        $region17: #{tpu_custom_call.1} parent=15 // pred_check
          %p161 = pneg %p56
        $region18: #{tpu_custom_call.1} parent=15 // pred_check_branch
          %163 = sbr.rel (%p161) target = $region20
        $region19: #{tpu_custom_call.1} parent=15 // pred_region
          %s164 = sand.u32 %s46, 1
          %s165 = scalar_lea.sflag [#allocation5], %s164
          %s166 = sand.u32 %s46, 1
          %s167 = smul.addr %s166, 8
          %s168 = scalar_lea.vmem [#allocation4], %s167
          %s170 = ssub.s32 128, 128
          %171 = vsyncadd %s165, %s170
          %s172 = sadd.s32 %s30, %s29
          %s173 = smul.addr %s172, 128
          %s174 = scalar_lea.hbm %s0, %s173
          %s176 = sshll.u32 %s168, 4
          %s177 = int_to_ptr.vmem [resolvable:$true] %s176
          %179 = dma.hbm_to_vmem [thread:$0]  %s174, 128, %s177, %s165
        $region20: #{tpu_custom_call.1} parent=15 // pred_fallthru
          _
        // Predicated region
        $region21: #{tpu_custom_call.1} parent=15 // pred_check
          %p180 = pneg %p84
        $region22: #{tpu_custom_call.1} parent=15 // pred_check_branch
          %182 = sbr.rel (%p180) target = $region24
        $region23: #{tpu_custom_call.1} parent=15 // pred_region
          %s183 = sand.u32 %s74, 1
          %s184 = scalar_lea.sflag [#allocation8], %s183
          %s185 = sand.u32 %s74, 1
          %s186 = smul.addr %s185, 8
          %s187 = scalar_lea.vmem [#allocation7], %s186
          %s189 = ssub.s32 128, 128
          %190 = vsyncadd %s184, %s189
          %s191 = sadd.s32 %s30, %s29
          %s192 = smul.addr %s191, 128
          %s193 = scalar_lea.hbm %s1, %s192
          %s195 = sshll.u32 %s187, 4
          %s196 = int_to_ptr.vmem [resolvable:$true] %s195
          %198 = dma.hbm_to_vmem [thread:$0]  %s193, 128, %s196, %s184
        $region24: #{tpu_custom_call.1} parent=15 // pred_fallthru
          _
      $region16: #{tpu_custom_call.1} parent=5 // pred_fallthru
        _
      %p199 = scmp.le.s32.totalorder 1, %s22
      %p200 = scmp.lt.s32.totalorder %s22, 3
      %p201 = pnand %p199, %p200
      %p202 = pneg %p201
      // Predicated region
      $region25: #{tpu_custom_call.1} parent=5 // pred_check
        _
      $region26: #{tpu_custom_call.1} parent=5 // pred_check_branch
        %204 = sbr.rel (%p201) target = $region28
      $region27: #{tpu_custom_call.1} parent=5 // pred_region
        %s205 = ssub.s32 %s22, 1
        %s206 = sand.u32 %s49, 1
        %s207 = scalar_lea.sflag [#allocation5], %s206
        %s208 = sand.u32 %s49, 1
        %s209 = smul.addr %s208, 8
        %s210 = scalar_lea.vmem [#allocation4], %s209
        // Predicated region
        $region29: #{tpu_custom_call.1} parent=27 // pred_check
          %p211 = pneg %p62
        $region30: #{tpu_custom_call.1} parent=27 // pred_check_branch
          %213 = sbr.rel (%p211) target = $region32
        $region31: #{tpu_custom_call.1} parent=27 // pred_region
          %214 = dma.done %s207, 128
        $region32: #{tpu_custom_call.1} parent=27 // pred_fallthru
          _
        %s215 = sand.u32 %s77, 1
        %s216 = scalar_lea.sflag [#allocation8], %s215
        %s217 = sand.u32 %s77, 1
        %s218 = smul.addr %s217, 8
        %s219 = scalar_lea.vmem [#allocation7], %s218
        // Predicated region
        $region33: #{tpu_custom_call.1} parent=27 // pred_check
          %p220 = pneg %p90
        $region34: #{tpu_custom_call.1} parent=27 // pred_check_branch
          %222 = sbr.rel (%p220) target = $region36
        $region35: #{tpu_custom_call.1} parent=27 // pred_region
          %223 = dma.done %s216, 128
        $region36: #{tpu_custom_call.1} parent=27 // pred_fallthru
          _
        %s224 = sand.u32 %s49, 1
        %s225 = scalar_lea.sflag [#allocation5], %s224
        %s226 = sand.u32 %s49, 1
        %s227 = smul.addr %s226, 8
        %s228 = scalar_lea.vmem [#allocation4], %s227
        %p229 = pneg %p62
        %p230 = pneg %p59
        %s231 = sand.u32 %s77, 1
        %s232 = scalar_lea.sflag [#allocation8], %s231
        %s233 = sand.u32 %s77, 1
        %s234 = smul.addr %s233, 8
        %s235 = scalar_lea.vmem [#allocation7], %s234
        %p236 = pneg %p90
        %p237 = pneg %p87
        %p238 = pneg %p116
        %p239 = pneg %p113
        %s240 = sand.u32 %s103, 1
        %s241 = scalar_lea.sflag [#allocation6], %s240
        %s242 = sand.u32 %s103, 1
        %s243 = scalar_lea.vmem [#allocation9], %s242
        %p244 = pneg %p142
        %p245 = pneg %p139
        %s246 = sand.u32 %s129, 1
        %s247 = scalar_lea.sflag [#allocation11], %s246
        %s248 = sand.u32 %s129, 1
        %s249 = scalar_lea.vmem [#allocation10], %s248
        %p250 = scmp.eq.s32.totalorder %s32, 0
        // Predicated region
        $region37: #{tpu_custom_call.1} parent=27 // pred_check
          %p251 = pneg %p250
        $region38: #{tpu_custom_call.1} parent=27 // pred_check_branch
          %253 = sbr.rel (%p251) target = $region40
        $region39: #{tpu_custom_call.1} parent=27 // pred_region
          %254 = vst [vmem:[#allocation2] sm:$0x1] 0.0
          %255 = vst [vmem:[#allocation3] sm:$0x1] 0.0
        $region40: #{tpu_custom_call.1} parent=27 // pred_fallthru
          _
        %v256 = vld [vmem:[%s210] sm:$0xff]
        %v257 = vld [vmem:[%s219] sm:$0xff]
        %v258 = vld [vmem:[#allocation2] sm:$0x1]
        %vm259 = vcmp.gt.f32.partialorder %v256, 0.0
        %v260 = vsel %vm259, 1, 0
        %v261 = vcvt.s32.f32 %v260
        %v262 = vrot.slane %v261, 4
        %v263 = vadd.f32 %v261, %v262
        %v264 = vrot.slane %v263, 2
        %v265 = vadd.f32 %v263, %v264
        %v266 = vrot.slane %v265, 1
        %v267 = vadd.f32 %v265, %v266
        %v268 = vadd.f32 %v258, %v267
        %269 = vst [vmem:[#allocation2] sm:$0x1] %v268
        %v270 = vld [vmem:[#allocation3] sm:$0x1]
        %v271 = vsub.f32 %v256, %v257
        %v272 = vand.u32 2147483647, %v271
        %v273 = vrot.slane %v272, 4
        %v274 = vadd.f32 %v272, %v273
        %v275 = vrot.slane %v274, 2
        %v276 = vadd.f32 %v274, %v275
        %v277 = vrot.slane %v276, 1
        %v278 = vadd.f32 %v276, %v277
        %v279 = vadd.f32 %v270, %v278
        %280 = vst [vmem:[#allocation3] sm:$0x1] %v279
        // Predicated region
        $region41: #{tpu_custom_call.1} parent=27 // pred_check
          %p281 = pneg %p250
        $region42: #{tpu_custom_call.1} parent=27 // pred_check_branch
          %283 = sbr.rel (%p281) target = $region44
        $region43: #{tpu_custom_call.1} parent=27 // pred_region
          %v284 = vld [vmem:[#allocation2] sm:$0x1]
          %285 = vst [vmem:[%s243] sm:$0x1] %v284
          %v286 = vld [vmem:[#allocation3] sm:$0x1]
          %287 = vst [vmem:[%s249] sm:$0x1] %v286
        $region44: #{tpu_custom_call.1} parent=27 // pred_fallthru
          _
        %s288 = sand.u32 %s103, 1
        %s289 = scalar_lea.sflag [#allocation6], %s288
        %s290 = sand.u32 %s103, 1
        %s291 = scalar_lea.vmem [#allocation9], %s290
        %s292 = sand.u32 %s129, 1
        %s293 = scalar_lea.sflag [#allocation11], %s292
        %s294 = sand.u32 %s129, 1
        %s295 = scalar_lea.vmem [#allocation10], %s294
        // Predicated region
        $region45: #{tpu_custom_call.1} parent=27 // pred_check
          %p296 = pneg %p113
        $region46: #{tpu_custom_call.1} parent=27 // pred_check_branch
          %298 = sbr.rel (%p296) target = $region48
        $region47: #{tpu_custom_call.1} parent=27 // pred_region
          %s300 = ssub.s32 16, 16
          %301 = vsyncadd %s289, %s300
          %s302 = smul.addr %s31, 16
          %s303 = scalar_lea.hbm %s2, %s302
          %s305 = sshll.u32 %s291, 4
          %s306 = int_to_ptr.vmem [resolvable:$true] %s305
          %308 = dma.vmem_to_hbm [thread:$0]  %s306, 16, %s303, %s289
        $region48: #{tpu_custom_call.1} parent=27 // pred_fallthru
          _
        // Predicated region
        $region49: #{tpu_custom_call.1} parent=27 // pred_check
          %p309 = pneg %p139
        $region50: #{tpu_custom_call.1} parent=27 // pred_check_branch
          %311 = sbr.rel (%p309) target = $region52
        $region51: #{tpu_custom_call.1} parent=27 // pred_region
          %s313 = ssub.s32 16, 16
          %314 = vsyncadd %s293, %s313
          %s315 = smul.addr %s31, 16
          %s316 = scalar_lea.hbm %s3, %s315
          %s318 = sshll.u32 %s295, 4
          %s319 = int_to_ptr.vmem [resolvable:$true] %s318
          %321 = dma.vmem_to_hbm [thread:$0]  %s319, 16, %s316, %s293
        $region52: #{tpu_custom_call.1} parent=27 // pred_fallthru
          _
      $region28: #{tpu_custom_call.1} parent=5 // pred_fallthru
        _
      %p322 = scmp.le.s32.totalorder 2, %s22
      // Predicated region
      $region53: #{tpu_custom_call.1} parent=5 // pred_check
        %p323 = pneg %p322
      $region54: #{tpu_custom_call.1} parent=5 // pred_check_branch
        %325 = sbr.rel (%p323) target = $region56
      $region55: #{tpu_custom_call.1} parent=5 // pred_region
        %s326 = ssub.s32 %s22, 2
        // Predicated region
        $region57: #{tpu_custom_call.1} parent=55 // pred_check
          %p327 = pneg %p119
        $region58: #{tpu_custom_call.1} parent=55 // pred_check_branch
          %329 = sbr.rel (%p327) target = $region60
        $region59: #{tpu_custom_call.1} parent=55 // pred_region
          %s330 = sand.u32 %s104, 1
          %s331 = scalar_lea.sflag [#allocation6], %s330
          %s332 = sand.u32 %s104, 1
          %s333 = scalar_lea.vmem [#allocation9], %s332
          %334 = dma.done %s331, 16
        $region60: #{tpu_custom_call.1} parent=55 // pred_fallthru
          _
        // Predicated region
        $region61: #{tpu_custom_call.1} parent=55 // pred_check
          %p335 = pneg %p145
        $region62: #{tpu_custom_call.1} parent=55 // pred_check_branch
          %337 = sbr.rel (%p335) target = $region64
        $region63: #{tpu_custom_call.1} parent=55 // pred_region
          %s338 = sand.u32 %s130, 1
          %s339 = scalar_lea.sflag [#allocation11], %s338
          %s340 = sand.u32 %s130, 1
          %s341 = scalar_lea.vmem [#allocation10], %s340
          %342 = dma.done %s339, 16
        $region64: #{tpu_custom_call.1} parent=55 // pred_fallthru
          _
      $region56: #{tpu_custom_call.1} parent=5 // pred_fallthru
        _
    $region6: #{tpu_custom_call.1} parent=1 // loop_footer
      %s26 = sadd.s32 1, %s22
    $region7: #{tpu_custom_call.1} parent=1 // loop_footer_branch
      %21 = sbr.rel target = $region3
    $region8: #{tpu_custom_call.1} parent=1 // loop_exit
      _
    %343 = vsyncpa [#allocation5], 1
    %s344 = scalar_lea.sflag [#allocation5], 1
    %345 = vsyncpa %s344, 1
    %346 = vsyncpa [#allocation8], 1
    %s347 = scalar_lea.sflag [#allocation8], 1
    %348 = vsyncpa %s347, 1
    %349 = vsyncpa [#allocation6], 1
    %s350 = scalar_lea.sflag [#allocation6], 1
    %351 = vsyncpa %s350, 1
    %352 = vsyncpa [#allocation11], 1
    %s353 = scalar_lea.sflag [#allocation11], 1
    %354 = vsyncpa %s353, 1

</llo_original>
